<compile_context>
chip_gen: v7x
topology: tpu7x:2x2x1
jax: 0.10.0
libtpu: 0.0.40
codegen_flags: <defaults>
</compile_context>

<pallas_src>
import jax
import jax.numpy as jnp
from jax.experimental import pallas as pl
from jax.experimental.pallas import tpu as pltpu

# Small, module-consistent shapes.
B, S, H, C = 2, 8, 32, 2            # batch, seq, hidden_size, num_classes
VOCAB, NSEG, FFN = 100, 2, 64       # vocab, token-type count, FFN width

SLAB_W = 128                        # lane width of packed parameter slabs
C_PAD = 128                         # lane-padded classifier width

# Weight-slab row offsets (all multiples of 16 -> clean bf16 sublane tiles).
R_WQKV = 0                          # (H, 3H)
R_WO = H                            # (H, H)
R_W1 = 2 * H                        # (H, FFN)
R_W2 = 3 * H                        # (FFN, H)
R_WP = 3 * H + FFN                  # (H, H)
R_WC = 4 * H + FFN                  # (H, C_PAD)
WSLAB_ROWS = 5 * H + FFN            # 224

# Small-param slab rows (f32): biases + LayerNorm gains/offsets.
P_LN_E_G, P_LN_E_B = 0, 1
P_BQKV = 2
P_BO = 3
P_LN1_G, P_LN1_B = 4, 5
P_B1 = 6
P_B2 = 7
P_LN2_G, P_LN2_B = 8, 9
P_BP = 10
P_BC = 11
PSLAB_ROWS = 16


# ---------------------------------------------------------------------------
# In-kernel helpers (f32 element-wise math; bf16 only at MXU inputs)
# ---------------------------------------------------------------------------
def _layer_norm(x, g, b, eps=1e-12):
    mu = jnp.mean(x, axis=-1, keepdims=True)
    var = jnp.mean(jnp.square(x - mu), axis=-1, keepdims=True)
    return (x - mu) * jax.lax.rsqrt(var + eps) * g + b


def _gelu(x):
    # TODO(synk): switch to exact erf-based GELU to match HF KoBERT bit-for-bit.
    c = jnp.sqrt(2.0 / jnp.pi).astype(x.dtype)
    return 0.5 * x * (1.0 + jnp.tanh(c * (x + 0.044715 * x * x * x)))


# ---------------------------------------------------------------------------
# Fused kernel: mask + encoder layer + pooler + classifier for the whole batch
# in a single invocation (flattened (B*S, H) activations).
# ---------------------------------------------------------------------------
def bert_classifier_kernel(vl_ref, emb_ref, wslab_ref, pslab_ref, out_ref):
    f32 = jnp.float32
    bf16 = jnp.bfloat16

    # Embedding LayerNorm (f32) over the whole flattened batch.
    x = _layer_norm(emb_ref[...],                      # (B*S, H)
                    pslab_ref[P_LN_E_G:P_LN_E_G + 1, :H],
                    pslab_ref[P_LN_E_B:P_LN_E_B + 1, :H])

    # Fused QKV projection: one MXU matmul for the whole batch.
    qkv = jnp.dot(x.astype(bf16), wslab_ref[R_WQKV:R_WQKV + H, :3 * H],
                  preferred_element_type=f32) + pslab_ref[P_BQKV:P_BQKV + 1, :3 * H]

    # Per-batch-row single-head attention (static, unrolled loop over B=2).
    scale = f32(1.0) / jnp.sqrt(f32(H))
    col = jax.lax.broadcasted_iota(jnp.int32, (1, S), 1)
    ctx_rows = []
    for bi in range(B):
        r0 = bi * S
        q = qkv[r0:r0 + S, 0:H]
        k = qkv[r0:r0 + S, H:2 * H]
        v = qkv[r0:r0 + S, 2 * H:3 * H]

        # Fused gen_attention_mask: additive bias from valid_length (SMEM).
        mask_bias = jnp.where(col < vl_ref[bi], f32(0.0), f32(-10000.0))   # (1, S)

        scores = jax.lax.dot_general(q.astype(bf16), k.astype(bf16),
                                     (((1,), (1,)), ((), ())),
                                     preferred_element_type=f32) * scale + mask_bias
        m = jnp.max(scores, axis=-1, keepdims=True)
        e = jnp.exp(scores - m)
        p = e * pl.reciprocal(jnp.sum(e, axis=-1, keepdims=True), approx=True)
        ctx_rows.append(jnp.dot(p.astype(bf16), v.astype(bf16),
                                preferred_element_type=f32))              # (S, H)
    ctx = jnp.concatenate(ctx_rows, axis=0)                               # (B*S, H)

    attn = jnp.dot(ctx.astype(bf16), wslab_ref[R_WO:R_WO + H, :H],
                   preferred_element_type=f32) + pslab_ref[P_BO:P_BO + 1, :H]
    h1 = _layer_norm(x + attn,
                     pslab_ref[P_LN1_G:P_LN1_G + 1, :H],
                     pslab_ref[P_LN1_B:P_LN1_B + 1, :H])

    # Feed-forward
    f = jnp.dot(h1.astype(bf16), wslab_ref[R_W1:R_W1 + H, :FFN],
                preferred_element_type=f32) + pslab_ref[P_B1:P_B1 + 1, :FFN]
    f = _gelu(f)
    f = jnp.dot(f.astype(bf16), wslab_ref[R_W2:R_W2 + FFN, :H],
                preferred_element_type=f32) + pslab_ref[P_B2:P_B2 + 1, :H]
    h2 = _layer_norm(h1 + f,
                     pslab_ref[P_LN2_G:P_LN2_G + 1, :H],
                     pslab_ref[P_LN2_B:P_LN2_B + 1, :H])

    # Pooler: tanh(W_p @ h[CLS] + b_p); CLS = row bi*S of each batch element.
    cls = jnp.concatenate([h2[bi * S:bi * S + 1, :] for bi in range(B)], axis=0)  # (B, H)
    pooled = jnp.tanh(jnp.dot(cls.astype(bf16), wslab_ref[R_WP:R_WP + H, :H],
                              preferred_element_type=f32)
                      + pslab_ref[P_BP:P_BP + 1, :H])

    # dr_rate=None -> no dropout (eval / default path of the module).
    # TODO(synk): implement dropout via pltpu.prng_seed/prng_random_bits if dr_rate is set.

    # Classifier head, lane-padded to 128 (columns C..127 of W/b are zero).
    logits = jnp.dot(pooled.astype(bf16), wslab_ref[R_WC:R_WC + H, :],
                     preferred_element_type=f32) + pslab_ref[P_BC:P_BC + 1, :]
    out_ref[...] = logits.astype(out_ref.dtype)            # (B, 128): one unmasked store


# ---------------------------------------------------------------------------
# Parameter construction + packing
# ---------------------------------------------------------------------------
def init_params(key):
    ks = jax.random.split(key, 11)

    def w(k, shape, fan_in):
        return jax.random.normal(k, shape, jnp.float32) / jnp.sqrt(jnp.float32(fan_in))

    wq = w(ks[3], (H, H), H)
    wk = w(ks[4], (H, H), H)
    wv = w(ks[5], (H, H), H)
    wo = w(ks[6], (H, H), H)
    w1 = w(ks[7], (H, FFN), H)
    w2 = w(ks[8], (FFN, H), FFN)
    wp = w(ks[9], (H, H), H)
    wc = w(ks[10], (H, C), H)

    def pad_cols(a):
        return jnp.pad(a, ((0, 0), (0, SLAB_W - a.shape[1])))

    # Packed bf16 weight slab: fused QKV + attn-out + FFN + pooler + classifier.
    wqkv = jnp.concatenate([wq, wk, wv], axis=1)                  # (H, 3H)
    wslab = jnp.concatenate(
        [pad_cols(wqkv), pad_cols(wo), pad_cols(w1), pad_cols(w2),
         pad_cols(wp), pad_cols(wc)], axis=0).astype(jnp.bfloat16)  # (224, 128)

    # Packed f32 slab for all tiny bias / LayerNorm params.
    def prow(v):
        v = v.reshape(1, -1)
        return jnp.pad(v, ((0, 0), (0, SLAB_W - v.shape[1])))

    rows = [
        prow(jnp.ones((H,), jnp.float32)),   prow(jnp.zeros((H,), jnp.float32)),   # ln_e
        prow(jnp.zeros((3 * H,), jnp.float32)),                                    # bqkv
        prow(jnp.zeros((H,), jnp.float32)),                                        # bo
        prow(jnp.ones((H,), jnp.float32)),   prow(jnp.zeros((H,), jnp.float32)),   # ln1
        prow(jnp.zeros((FFN,), jnp.float32)),                                      # b1
        prow(jnp.zeros((H,), jnp.float32)),                                        # b2
        prow(jnp.ones((H,), jnp.float32)),   prow(jnp.zeros((H,), jnp.float32)),   # ln2
        prow(jnp.zeros((H,), jnp.float32)),                                        # bp
        prow(jnp.zeros((C_PAD,), jnp.float32)),                                    # bc (padded)
    ]
    rows.append(jnp.zeros((PSLAB_ROWS - len(rows), SLAB_W), jnp.float32))
    pslab = jnp.concatenate(rows, axis=0)                          # (16, 128)

    return dict(
        tok_emb=jax.random.normal(ks[0], (VOCAB, H), jnp.float32) * 0.02,
        seg_emb=jax.random.normal(ks[1], (NSEG, H), jnp.float32) * 0.02,
        pos_emb=jax.random.normal(ks[2], (S, H), jnp.float32) * 0.02,
        wslab=wslab,
        pslab=pslab,
    )


# ---------------------------------------------------------------------------
# Forward wrapper (single pallas_call, single grid step)
# ---------------------------------------------------------------------------
@jax.jit
def bert_classifier_forward(params, token_ids, valid_length, segment_ids):
    # Embedding gathers are glue (plain JAX); flatten batch+seq for the kernel.
    emb = (params['tok_emb'][token_ids]
           + params['seg_emb'][segment_ids]
           + params['pos_emb'][None, :, :]).reshape(B * S, H)       # (B*S, H) f32

    out = pl.pallas_call(
        bert_classifier_kernel,
        out_shape=jax.ShapeDtypeStruct((B, C_PAD), jnp.float32),
        grid_spec=pltpu.PrefetchScalarGridSpec(
            num_scalar_prefetch=1,                                  # valid_length -> SMEM
            grid=(1,),
            in_specs=[
                pl.BlockSpec((B * S, H), lambda i, vl: (0, 0)),              # emb
                pl.BlockSpec((WSLAB_ROWS, SLAB_W), lambda i, vl: (0, 0)),    # weight slab
                pl.BlockSpec((PSLAB_ROWS, SLAB_W), lambda i, vl: (0, 0)),    # bias/LN slab
            ],
            out_specs=pl.BlockSpec((B, C_PAD), lambda i, vl: (0, 0)),
        ),
        compiler_params=pltpu.CompilerParams(
            dimension_semantics=("arbitrary",)),
    )(valid_length.astype(jnp.int32), emb, params['wslab'], params['pslab'])

    return out[:, :C]                                               # (B, C)


if __name__ == "__main__":
    key = jax.random.PRNGKey(0)
    kp, kt = jax.random.split(key, 2)

    params = init_params(kp)
    token_ids = jax.random.randint(kt, (B, S), 0, VOCAB, dtype=jnp.int32)
    segment_ids = jnp.zeros((B, S), jnp.int32)
    valid_length = jnp.array([5, 8], jnp.int32)

    logits = bert_classifier_forward(params, token_ids, valid_length, segment_ids)
    jax.block_until_ready(logits)
    assert logits.shape == (B, C) and logits.dtype == jnp.float32
    assert bool(jnp.all(jnp.isfinite(logits)))
    print("KERNEL_OK")
</pallas_src>

<mosaic_0001>
module attributes {stable_mosaic.version = 11 : i64} {
  func.func @bert_classifier_kernel(%arg0: i32, %arg1: memref<2xi32, #tpu.memory_space<smem>>, %arg2: memref<16x32xf32, #tpu.memory_space<vmem>>, %arg3: memref<224x128xbf16, #tpu.memory_space<vmem>>, %arg4: memref<16x128xf32, #tpu.memory_space<vmem>>, %arg5: memref<2x128xf32, #tpu.memory_space<vmem>>) attributes {dimension_semantics = [#tpu.dimension_semantics<arbitrary>], iteration_bounds = array<i64: 1>, scalar_prefetch = 1 : i64, scratch_operands = 0 : i64, tpu.core_type = #tpu.core_type<tc>, window_params = [{pipeline_mode = #tpu.pipeline_mode<synchronous>, transform_indices = @transform_0, window_bounds = array<i64: 16, 32>}, {pipeline_mode = #tpu.pipeline_mode<synchronous>, transform_indices = @transform_1, window_bounds = array<i64: 224, 128>}, {pipeline_mode = #tpu.pipeline_mode<synchronous>, transform_indices = @transform_2, window_bounds = array<i64: 16, 128>}, {pipeline_mode = #tpu.pipeline_mode<synchronous>, transform_indices = @transform_3, window_bounds = array<i64: 2, 128>}]} {
    %c0 = arith.constant 0 : index
    %c0_0 = arith.constant 0 : index
    %0 = vector.load %arg2[%c0, %c0_0] : memref<16x32xf32, #tpu.memory_space<vmem>>, vector<16x32xf32>
    %c0_1 = arith.constant 0 : index
    %c0_2 = arith.constant 0 : index
    %1 = vector.load %arg4[%c0_1, %c0_2] : memref<16x128xf32, #tpu.memory_space<vmem>>, vector<1x32xf32>
    %c1 = arith.constant 1 : index
    %c0_3 = arith.constant 0 : index
    %2 = vector.load %arg4[%c1, %c0_3] : memref<16x128xf32, #tpu.memory_space<vmem>>, vector<1x32xf32>
    %cst = arith.constant dense<0.000000e+00> : vector<16xf32>
    %3 = vector.multi_reduction <add>, %0, %cst [1] : vector<16x32xf32> to vector<16xf32>
    %4 = vector.shape_cast %3 : vector<16xf32> to vector<16x1xf32>
    %cst_4 = arith.constant 3.200000e+01 : f32
    %5 = vector.broadcast %cst_4 : f32 to vector<16x1xf32>
    %6 = arith.divf %4, %5 : vector<16x1xf32>
    %7 = vector.broadcast %6 : vector<16x1xf32> to vector<16x32xf32>
    %8 = arith.subf %0, %7 : vector<16x32xf32>
    %9 = arith.mulf %8, %8 : vector<16x32xf32>
    %cst_5 = arith.constant dense<0.000000e+00> : vector<16xf32>
    %10 = vector.multi_reduction <add>, %9, %cst_5 [1] : vector<16x32xf32> to vector<16xf32>
    %11 = vector.shape_cast %10 : vector<16xf32> to vector<16x1xf32>
    %cst_6 = arith.constant 3.200000e+01 : f32
    %12 = vector.broadcast %cst_6 : f32 to vector<16x1xf32>
    %13 = arith.divf %11, %12 : vector<16x1xf32>
    %14 = vector.broadcast %6 : vector<16x1xf32> to vector<16x32xf32>
    %15 = arith.subf %0, %14 : vector<16x32xf32>
    %cst_7 = arith.constant 9.99999996E-13 : f32
    %16 = vector.broadcast %cst_7 : f32 to vector<16x1xf32>
    %17 = arith.addf %13, %16 : vector<16x1xf32>
    %18 = math.rsqrt %17 : vector<16x1xf32>
    %19 = vector.broadcast %18 : vector<16x1xf32> to vector<16x32xf32>
    %20 = arith.mulf %15, %19 : vector<16x32xf32>
    %21 = vector.broadcast %1 : vector<1x32xf32> to vector<16x32xf32>
    %22 = arith.mulf %20, %21 : vector<16x32xf32>
    %23 = vector.broadcast %2 : vector<1x32xf32> to vector<16x32xf32>
    %24 = arith.addf %22, %23 : vector<16x32xf32>
    %25 = arith.truncf %24 : vector<16x32xf32> to vector<16x32xbf16>
    %c0_8 = arith.constant 0 : index
    %c0_9 = arith.constant 0 : index
    %26 = vector.load %arg3[%c0_8, %c0_9] : memref<224x128xbf16, #tpu.memory_space<vmem>>, vector<32x96xbf16>
    %cst_10 = arith.constant dense<0.000000e+00> : vector<16x96xf32>
    %27 = tpu.matmul %25, %26, %cst_10 {dimension_numbers = #tpu.dot_dimension_numbers<[1], [0], [0], [1], [0, 0, 1, 1], [], []>} : vector<16x32xbf16>, vector<32x96xbf16>, vector<16x96xf32> -> vector<16x96xf32>
    %c2 = arith.constant 2 : index
    %c0_11 = arith.constant 0 : index
    %28 = vector.load %arg4[%c2, %c0_11] : memref<16x128xf32, #tpu.memory_space<vmem>>, vector<1x96xf32>
    %29 = vector.broadcast %28 : vector<1x96xf32> to vector<16x96xf32>
    %30 = arith.addf %27, %29 : vector<16x96xf32>
    %cst_12 = arith.constant 3.200000e+01 : f32
    %31 = math.sqrt %cst_12 : f32
    %cst_13 = arith.constant 1.000000e+00 : f32
    %32 = arith.divf %cst_13, %31 : f32
    %33 = tpu.iota {dimensions = array<i32: 1>} : vector<1x8xi32>
    %34 = vector.extract_strided_slice %30 {offsets = [0, 0], sizes = [8, 32], strides = [1, 1]} : vector<16x96xf32> to vector<8x32xf32>
    %35 = vector.extract_strided_slice %30 {offsets = [0, 32], sizes = [8, 32], strides = [1, 1]} : vector<16x96xf32> to vector<8x32xf32>
    %36 = vector.extract_strided_slice %30 {offsets = [0, 64], sizes = [8, 32], strides = [1, 1]} : vector<16x96xf32> to vector<8x32xf32>
    %c0_14 = arith.constant 0 : index
    %37 = memref.load %arg1[%c0_14] : memref<2xi32, #tpu.memory_space<smem>>
    %38 = vector.broadcast %37 : i32 to vector<1x8xi32>
    %39 = arith.cmpi slt, %33, %38 : vector<1x8xi32>
    %cst_15 = arith.constant 0.000000e+00 : f32
    %cst_16 = arith.constant -1.000000e+04 : f32
    %40 = vector.broadcast %cst_15 : f32 to vector<1x8xf32>
    %41 = vector.broadcast %cst_16 : f32 to vector<1x8xf32>
    %42 = arith.select %39, %40, %41 : vector<1x8xi1>, vector<1x8xf32>
    %43 = arith.truncf %34 : vector<8x32xf32> to vector<8x32xbf16>
    %44 = arith.truncf %35 : vector<8x32xf32> to vector<8x32xbf16>
    %cst_17 = arith.constant dense<0.000000e+00> : vector<8x8xf32>
    %45 = tpu.matmul %43, %44, %cst_17 {dimension_numbers = #tpu.dot_dimension_numbers<[1], [1], [0], [0], [0, 0, 1, 0], [], []>} : vector<8x32xbf16>, vector<8x32xbf16>, vector<8x8xf32> -> vector<8x8xf32>
    %46 = vector.broadcast %32 : f32 to vector<8x8xf32>
    %47 = arith.mulf %45, %46 : vector<8x8xf32>
    %48 = vector.broadcast %42 : vector<1x8xf32> to vector<8x8xf32>
    %49 = arith.addf %47, %48 : vector<8x8xf32>
    %cst_18 = arith.constant dense<0xFF800000> : vector<8xf32>
    %50 = vector.multi_reduction <maximumf>, %49, %cst_18 [1] : vector<8x8xf32> to vector<8xf32>
    %51 = vector.shape_cast %50 : vector<8xf32> to vector<8x1xf32>
    %52 = vector.broadcast %51 : vector<8x1xf32> to vector<8x8xf32>
    %53 = arith.subf %49, %52 : vector<8x8xf32>
    %54 = math.exp %53 : vector<8x8xf32>
    %cst_19 = arith.constant dense<0.000000e+00> : vector<8xf32>
    %55 = vector.multi_reduction <add>, %54, %cst_19 [1] : vector<8x8xf32> to vector<8xf32>
    %56 = vector.shape_cast %55 : vector<8xf32> to vector<8x1xf32>
    %57 = tpu.reciprocal %56 {approx = true} : vector<8x1xf32> -> vector<8x1xf32>
    %58 = vector.broadcast %57 : vector<8x1xf32> to vector<8x8xf32>
    %59 = arith.mulf %54, %58 : vector<8x8xf32>
    %60 = arith.truncf %59 : vector<8x8xf32> to vector<8x8xbf16>
    %61 = arith.truncf %36 : vector<8x32xf32> to vector<8x32xbf16>
    %cst_20 = arith.constant dense<0.000000e+00> : vector<8x32xf32>
    %62 = tpu.matmul %60, %61, %cst_20 {dimension_numbers = #tpu.dot_dimension_numbers<[1], [0], [0], [1], [0, 0, 1, 1], [], []>} : vector<8x8xbf16>, vector<8x32xbf16>, vector<8x32xf32> -> vector<8x32xf32>
    %63 = vector.extract_strided_slice %30 {offsets = [8, 0], sizes = [8, 32], strides = [1, 1]} : vector<16x96xf32> to vector<8x32xf32>
    %64 = vector.extract_strided_slice %30 {offsets = [8, 32], sizes = [8, 32], strides = [1, 1]} : vector<16x96xf32> to vector<8x32xf32>
    %65 = vector.extract_strided_slice %30 {offsets = [8, 64], sizes = [8, 32], strides = [1, 1]} : vector<16x96xf32> to vector<8x32xf32>
    %c1_21 = arith.constant 1 : index
    %66 = memref.load %arg1[%c1_21] : memref<2xi32, #tpu.memory_space<smem>>
    %67 = vector.broadcast %66 : i32 to vector<1x8xi32>
    %68 = arith.cmpi slt, %33, %67 : vector<1x8xi32>
    %cst_22 = arith.constant 0.000000e+00 : f32
    %cst_23 = arith.constant -1.000000e+04 : f32
    %69 = vector.broadcast %cst_22 : f32 to vector<1x8xf32>
    %70 = vector.broadcast %cst_23 : f32 to vector<1x8xf32>
    %71 = arith.select %68, %69, %70 : vector<1x8xi1>, vector<1x8xf32>
    %72 = arith.truncf %63 : vector<8x32xf32> to vector<8x32xbf16>
    %73 = arith.truncf %64 : vector<8x32xf32> to vector<8x32xbf16>
    %cst_24 = arith.constant dense<0.000000e+00> : vector<8x8xf32>
    %74 = tpu.matmul %72, %73, %cst_24 {dimension_numbers = #tpu.dot_dimension_numbers<[1], [1], [0], [0], [0, 0, 1, 0], [], []>} : vector<8x32xbf16>, vector<8x32xbf16>, vector<8x8xf32> -> vector<8x8xf32>
    %75 = vector.broadcast %32 : f32 to vector<8x8xf32>
    %76 = arith.mulf %74, %75 : vector<8x8xf32>
    %77 = vector.broadcast %71 : vector<1x8xf32> to vector<8x8xf32>
    %78 = arith.addf %76, %77 : vector<8x8xf32>
    %cst_25 = arith.constant dense<0xFF800000> : vector<8xf32>
    %79 = vector.multi_reduction <maximumf>, %78, %cst_25 [1] : vector<8x8xf32> to vector<8xf32>
    %80 = vector.shape_cast %79 : vector<8xf32> to vector<8x1xf32>
    %81 = vector.broadcast %80 : vector<8x1xf32> to vector<8x8xf32>
    %82 = arith.subf %78, %81 : vector<8x8xf32>
    %83 = math.exp %82 : vector<8x8xf32>
    %cst_26 = arith.constant dense<0.000000e+00> : vector<8xf32>
    %84 = vector.multi_reduction <add>, %83, %cst_26 [1] : vector<8x8xf32> to vector<8xf32>
    %85 = vector.shape_cast %84 : vector<8xf32> to vector<8x1xf32>
    %86 = tpu.reciprocal %85 {approx = true} : vector<8x1xf32> -> vector<8x1xf32>
    %87 = vector.broadcast %86 : vector<8x1xf32> to vector<8x8xf32>
    %88 = arith.mulf %83, %87 : vector<8x8xf32>
    %89 = arith.truncf %88 : vector<8x8xf32> to vector<8x8xbf16>
    %90 = arith.truncf %65 : vector<8x32xf32> to vector<8x32xbf16>
    %cst_27 = arith.constant dense<0.000000e+00> : vector<8x32xf32>
    %91 = tpu.matmul %89, %90, %cst_27 {dimension_numbers = #tpu.dot_dimension_numbers<[1], [0], [0], [1], [0, 0, 1, 1], [], []>} : vector<8x8xbf16>, vector<8x32xbf16>, vector<8x32xf32> -> vector<8x32xf32>
    %92 = tpu.concatenate %62, %91 in 0 : vector<8x32xf32>, vector<8x32xf32> -> vector<16x32xf32>
    %93 = arith.truncf %92 : vector<16x32xf32> to vector<16x32xbf16>
    %c32 = arith.constant 32 : index
    %c0_28 = arith.constant 0 : index
    %94 = vector.load %arg3[%c32, %c0_28] : memref<224x128xbf16, #tpu.memory_space<vmem>>, vector<32x32xbf16>
    %cst_29 = arith.constant dense<0.000000e+00> : vector<16x32xf32>
    %95 = tpu.matmul %93, %94, %cst_29 {dimension_numbers = #tpu.dot_dimension_numbers<[1], [0], [0], [1], [0, 0, 1, 1], [], []>} : vector<16x32xbf16>, vector<32x32xbf16>, vector<16x32xf32> -> vector<16x32xf32>
    %c3 = arith.constant 3 : index
    %c0_30 = arith.constant 0 : index
    %96 = vector.load %arg4[%c3, %c0_30] : memref<16x128xf32, #tpu.memory_space<vmem>>, vector<1x32xf32>
    %97 = vector.broadcast %96 : vector<1x32xf32> to vector<16x32xf32>
    %98 = arith.addf %95, %97 : vector<16x32xf32>
    %99 = arith.addf %24, %98 : vector<16x32xf32>
    %c4 = arith.constant 4 : index
    %c0_31 = arith.constant 0 : index
    %100 = vector.load %arg4[%c4, %c0_31] : memref<16x128xf32, #tpu.memory_space<vmem>>, vector<1x32xf32>
    %c5 = arith.constant 5 : index
    %c0_32 = arith.constant 0 : index
    %101 = vector.load %arg4[%c5, %c0_32] : memref<16x128xf32, #tpu.memory_space<vmem>>, vector<1x32xf32>
    %cst_33 = arith.constant dense<0.000000e+00> : vector<16xf32>
    %102 = vector.multi_reduction <add>, %99, %cst_33 [1] : vector<16x32xf32> to vector<16xf32>
    %103 = vector.shape_cast %102 : vector<16xf32> to vector<16x1xf32>
    %cst_34 = arith.constant 3.200000e+01 : f32
    %104 = vector.broadcast %cst_34 : f32 to vector<16x1xf32>
    %105 = arith.divf %103, %104 : vector<16x1xf32>
    %106 = vector.broadcast %105 : vector<16x1xf32> to vector<16x32xf32>
    %107 = arith.subf %99, %106 : vector<16x32xf32>
    %108 = arith.mulf %107, %107 : vector<16x32xf32>
    %cst_35 = arith.constant dense<0.000000e+00> : vector<16xf32>
    %109 = vector.multi_reduction <add>, %108, %cst_35 [1] : vector<16x32xf32> to vector<16xf32>
    %110 = vector.shape_cast %109 : vector<16xf32> to vector<16x1xf32>
    %cst_36 = arith.constant 3.200000e+01 : f32
    %111 = vector.broadcast %cst_36 : f32 to vector<16x1xf32>
    %112 = arith.divf %110, %111 : vector<16x1xf32>
    %113 = vector.broadcast %105 : vector<16x1xf32> to vector<16x32xf32>
    %114 = arith.subf %99, %113 : vector<16x32xf32>
    %cst_37 = arith.constant 9.99999996E-13 : f32
    %115 = vector.broadcast %cst_37 : f32 to vector<16x1xf32>
    %116 = arith.addf %112, %115 : vector<16x1xf32>
    %117 = math.rsqrt %116 : vector<16x1xf32>
    %118 = vector.broadcast %117 : vector<16x1xf32> to vector<16x32xf32>
    %119 = arith.mulf %114, %118 : vector<16x32xf32>
    %120 = vector.broadcast %100 : vector<1x32xf32> to vector<16x32xf32>
    %121 = arith.mulf %119, %120 : vector<16x32xf32>
    %122 = vector.broadcast %101 : vector<1x32xf32> to vector<16x32xf32>
    %123 = arith.addf %121, %122 : vector<16x32xf32>
    %124 = arith.truncf %123 : vector<16x32xf32> to vector<16x32xbf16>
    %c64 = arith.constant 64 : index
    %c0_38 = arith.constant 0 : index
    %125 = vector.load %arg3[%c64, %c0_38] : memref<224x128xbf16, #tpu.memory_space<vmem>>, vector<32x64xbf16>
    %cst_39 = arith.constant dense<0.000000e+00> : vector<16x64xf32>
    %126 = tpu.matmul %124, %125, %cst_39 {dimension_numbers = #tpu.dot_dimension_numbers<[1], [0], [0], [1], [0, 0, 1, 1], [], []>} : vector<16x32xbf16>, vector<32x64xbf16>, vector<16x64xf32> -> vector<16x64xf32>
    %c6 = arith.constant 6 : index
    %c0_40 = arith.constant 0 : index
    %127 = vector.load %arg4[%c6, %c0_40] : memref<16x128xf32, #tpu.memory_space<vmem>>, vector<1x64xf32>
    %128 = vector.broadcast %127 : vector<1x64xf32> to vector<16x64xf32>
    %129 = arith.addf %126, %128 : vector<16x64xf32>
    %cst_41 = arith.constant 0.636619746 : f32
    %130 = math.sqrt %cst_41 : f32
    %cst_42 = arith.constant 5.000000e-01 : f32
    %131 = vector.broadcast %cst_42 : f32 to vector<16x64xf32>
    %132 = arith.mulf %131, %129 : vector<16x64xf32>
    %cst_43 = arith.constant 4.471500e-02 : f32
    %133 = vector.broadcast %cst_43 : f32 to vector<16x64xf32>
    %134 = arith.mulf %133, %129 : vector<16x64xf32>
    %135 = arith.mulf %134, %129 : vector<16x64xf32>
    %136 = arith.mulf %135, %129 : vector<16x64xf32>
    %137 = arith.addf %129, %136 : vector<16x64xf32>
    %138 = vector.broadcast %130 : f32 to vector<16x64xf32>
    %139 = arith.mulf %138, %137 : vector<16x64xf32>
    %140 = math.tanh %139 : vector<16x64xf32>
    %cst_44 = arith.constant 1.000000e+00 : f32
    %141 = vector.broadcast %cst_44 : f32 to vector<16x64xf32>
    %142 = arith.addf %141, %140 : vector<16x64xf32>
    %143 = arith.mulf %132, %142 : vector<16x64xf32>
    %144 = arith.truncf %143 : vector<16x64xf32> to vector<16x64xbf16>
    %c96 = arith.constant 96 : index
    %c0_45 = arith.constant 0 : index
    %145 = vector.load %arg3[%c96, %c0_45] : memref<224x128xbf16, #tpu.memory_space<vmem>>, vector<64x32xbf16>
    %cst_46 = arith.constant dense<0.000000e+00> : vector<16x32xf32>
    %146 = tpu.matmul %144, %145, %cst_46 {dimension_numbers = #tpu.dot_dimension_numbers<[1], [0], [0], [1], [0, 0, 1, 1], [], []>} : vector<16x64xbf16>, vector<64x32xbf16>, vector<16x32xf32> -> vector<16x32xf32>
    %c7 = arith.constant 7 : index
    %c0_47 = arith.constant 0 : index
    %147 = vector.load %arg4[%c7, %c0_47] : memref<16x128xf32, #tpu.memory_space<vmem>>, vector<1x32xf32>
    %148 = vector.broadcast %147 : vector<1x32xf32> to vector<16x32xf32>
    %149 = arith.addf %146, %148 : vector<16x32xf32>
    %150 = arith.addf %123, %149 : vector<16x32xf32>
    %c8 = arith.constant 8 : index
    %c0_48 = arith.constant 0 : index
    %151 = vector.load %arg4[%c8, %c0_48] : memref<16x128xf32, #tpu.memory_space<vmem>>, vector<1x32xf32>
    %c9 = arith.constant 9 : index
    %c0_49 = arith.constant 0 : index
    %152 = vector.load %arg4[%c9, %c0_49] : memref<16x128xf32, #tpu.memory_space<vmem>>, vector<1x32xf32>
    %cst_50 = arith.constant dense<0.000000e+00> : vector<16xf32>
    %153 = vector.multi_reduction <add>, %150, %cst_50 [1] : vector<16x32xf32> to vector<16xf32>
    %154 = vector.shape_cast %153 : vector<16xf32> to vector<16x1xf32>
    %cst_51 = arith.constant 3.200000e+01 : f32
    %155 = vector.broadcast %cst_51 : f32 to vector<16x1xf32>
    %156 = arith.divf %154, %155 : vector<16x1xf32>
    %157 = vector.broadcast %156 : vector<16x1xf32> to vector<16x32xf32>
    %158 = arith.subf %150, %157 : vector<16x32xf32>
    %159 = arith.mulf %158, %158 : vector<16x32xf32>
    %cst_52 = arith.constant dense<0.000000e+00> : vector<16xf32>
    %160 = vector.multi_reduction <add>, %159, %cst_52 [1] : vector<16x32xf32> to vector<16xf32>
    %161 = vector.shape_cast %160 : vector<16xf32> to vector<16x1xf32>
    %cst_53 = arith.constant 3.200000e+01 : f32
    %162 = vector.broadcast %cst_53 : f32 to vector<16x1xf32>
    %163 = arith.divf %161, %162 : vector<16x1xf32>
    %164 = vector.broadcast %156 : vector<16x1xf32> to vector<16x32xf32>
    %165 = arith.subf %150, %164 : vector<16x32xf32>
    %cst_54 = arith.constant 9.99999996E-13 : f32
    %166 = vector.broadcast %cst_54 : f32 to vector<16x1xf32>
    %167 = arith.addf %163, %166 : vector<16x1xf32>
    %168 = math.rsqrt %167 : vector<16x1xf32>
    %169 = vector.broadcast %168 : vector<16x1xf32> to vector<16x32xf32>
    %170 = arith.mulf %165, %169 : vector<16x32xf32>
    %171 = vector.broadcast %151 : vector<1x32xf32> to vector<16x32xf32>
    %172 = arith.mulf %170, %171 : vector<16x32xf32>
    %173 = vector.broadcast %152 : vector<1x32xf32> to vector<16x32xf32>
    %174 = arith.addf %172, %173 : vector<16x32xf32>
    %175 = vector.extract_strided_slice %174 {offsets = [0, 0], sizes = [1, 32], strides = [1, 1]} : vector<16x32xf32> to vector<1x32xf32>
    %176 = vector.extract_strided_slice %174 {offsets = [8, 0], sizes = [1, 32], strides = [1, 1]} : vector<16x32xf32> to vector<1x32xf32>
    %177 = tpu.concatenate %175, %176 in 0 : vector<1x32xf32>, vector<1x32xf32> -> vector<2x32xf32>
    %178 = arith.truncf %177 : vector<2x32xf32> to vector<2x32xbf16>
    %c160 = arith.constant 160 : index
    %c0_55 = arith.constant 0 : index
    %179 = vector.load %arg3[%c160, %c0_55] : memref<224x128xbf16, #tpu.memory_space<vmem>>, vector<32x32xbf16>
    %cst_56 = arith.constant dense<0.000000e+00> : vector<2x32xf32>
    %180 = tpu.matmul %178, %179, %cst_56 {dimension_numbers = #tpu.dot_dimension_numbers<[1], [0], [0], [1], [0, 0, 1, 1], [], []>} : vector<2x32xbf16>, vector<32x32xbf16>, vector<2x32xf32> -> vector<2x32xf32>
    %c10 = arith.constant 10 : index
    %c0_57 = arith.constant 0 : index
    %181 = vector.load %arg4[%c10, %c0_57] : memref<16x128xf32, #tpu.memory_space<vmem>>, vector<1x32xf32>
    %182 = vector.broadcast %181 : vector<1x32xf32> to vector<2x32xf32>
    %183 = arith.addf %180, %182 : vector<2x32xf32>
    %184 = math.tanh %183 : vector<2x32xf32>
    %185 = arith.truncf %184 : vector<2x32xf32> to vector<2x32xbf16>
    %c192 = arith.constant 192 : index
    %c0_58 = arith.constant 0 : index
    %186 = vector.load %arg3[%c192, %c0_58] : memref<224x128xbf16, #tpu.memory_space<vmem>>, vector<32x128xbf16>
    %cst_59 = arith.constant dense<0.000000e+00> : vector<2x128xf32>
    %187 = tpu.matmul %185, %186, %cst_59 {dimension_numbers = #tpu.dot_dimension_numbers<[1], [0], [0], [1], [0, 0, 1, 1], [], []>} : vector<2x32xbf16>, vector<32x128xbf16>, vector<2x128xf32> -> vector<2x128xf32>
    %c11 = arith.constant 11 : index
    %c0_60 = arith.constant 0 : index
    %188 = vector.load %arg4[%c11, %c0_60] : memref<16x128xf32, #tpu.memory_space<vmem>>, vector<1x128xf32>
    %189 = vector.broadcast %188 : vector<1x128xf32> to vector<2x128xf32>
    %190 = arith.addf %187, %189 : vector<2x128xf32>
    %c0_61 = arith.constant 0 : index
    %c0_62 = arith.constant 0 : index
    %191 = vector.load %arg5[%c0_61, %c0_62] : memref<2x128xf32, #tpu.memory_space<vmem>>, vector<2x128xf32>
    tpu.vector_store %arg5[%c0_61, %c0_62], %190 {strides = array<i32>} : memref<2x128xf32, #tpu.memory_space<vmem>>, vector<2x128xf32>,
    return
  }
  func.func @transform_0(%arg0: i32, %arg1: memref<2xi32, #tpu.memory_space<smem>>) -> (i32, i32) {
    %c0_i32 = arith.constant 0 : i32
    %c0_i32_0 = arith.constant 0 : i32
    %c0_i32_1 = arith.constant 0 : i32
    return %c0_i32, %c0_i32_0 : i32, i32
  }
  func.func @transform_1(%arg0: i32, %arg1: memref<2xi32, #tpu.memory_space<smem>>) -> (i32, i32) {
    %c0_i32 = arith.constant 0 : i32
    %c0_i32_0 = arith.constant 0 : i32
    %c0_i32_1 = arith.constant 0 : i32
    return %c0_i32, %c0_i32_0 : i32, i32
  }
  func.func @transform_2(%arg0: i32, %arg1: memref<2xi32, #tpu.memory_space<smem>>) -> (i32, i32) {
    %c0_i32 = arith.constant 0 : i32
    %c0_i32_0 = arith.constant 0 : i32
    %c0_i32_1 = arith.constant 0 : i32
    return %c0_i32, %c0_i32_0 : i32, i32
  }
  func.func @transform_3(%arg0: i32, %arg1: memref<2xi32, #tpu.memory_space<smem>>) -> (i32, i32) {
    %c0_i32 = arith.constant 0 : i32
    %c0_i32_0 = arith.constant 0 : i32
    %c0_i32_1 = arith.constant 0 : i32
    return %c0_i32, %c0_i32_0 : i32, i32
  }
}

</mosaic_0001>

<llo_original>
// kernel: bert_classifier_forward.1
$region0: #{bert_classifier_forward.1}
  #allocation0 [shape = 'u32[]', space=smem, size = 0x4, offset = 0x4, fixed_abs, tag = 'smem constant byte address 0x4 - core index']
  #allocation1 [shape = 'u32[144,128]{1,0:T(1,128)}', space=vmem, size = 0x12000, scoped, tag = 'internal scratch']
  #allocation2 [shape = 's32[1]{0}', space=sflag, size = 0x4, scoped, tag = 'scoped memory for bert_classifier_forward.1']
  #allocation3 [shape = 'u8[512]{0}', space=smem, size = 0x200, scoped, tag = 'prefetched SMEM operand 0']
  %s0 = inlined_call_operand.vmem [shape: s32[2], index: 0, kind: input, shape index: {}]
  %s1 = inlined_call_operand.vmem [shape: f32[16,32], index: 1, kind: input, shape index: {}]
  %s2 = inlined_call_operand.vmem [shape: bf16[224,128], index: 2, kind: input, shape index: {}]
  %s3 = inlined_call_operand.vmem [shape: f32[16,128], index: 3, kind: input, shape index: {}]
  %s4 = inlined_call_operand.hbm [shape: f32[2,128], index: 4, kind: output, shape index: {}]
  %s5 = sld [smem:[#allocation0]]
  $region22: #{bert_classifier_forward.1} parent=0
    _
  %s7 = ssub.s32 1, %s5
  %s8 = scalar_select 0, %s7, %s5
  %s9 = sshll.u32 %s0, 4
  %s10 = int_to_ptr.vmem [resolvable:$true] %s9
  %12 = dma.vmem_to_smem %s10, 16, [#allocation3], [#allocation2]
  %13 = dma.done [#allocation2], 16
  %14 = sfence
  $region1: #{bert_classifier_forward.1} parent=0
    #allocation4 [shape = 'u8[1024]{0}', space=vmem, size = 0x400, scoped, tag = 'output window, operand 0, single buffered']
    #allocation5 [shape = 's32[1]{0}', space=sflag, size = 0x4, scoped, tag = 'scoped memory for bert_classifier_forward.1']
    %15 = vsyncpa [#allocation5], 0
    // Predicated region
    $region2: #{bert_classifier_forward.1} parent=1 // pred_check
      _
    $region3: #{bert_classifier_forward.1} parent=1 // pred_check_branch
      %17 = sbr.rel (0) target = $region5
    $region4: #{bert_classifier_forward.1} parent=1 // pred_region
      _
    $region5: #{bert_classifier_forward.1} parent=1 // pred_fallthru
      _
    // Predicated region
    $region6: #{bert_classifier_forward.1} parent=1 // pred_check
      _
    $region7: #{bert_classifier_forward.1} parent=1 // pred_check_branch
      %19 = sbr.rel (0) target = $region9
    $region8: #{bert_classifier_forward.1} parent=1 // pred_region
      _
    $region9: #{bert_classifier_forward.1} parent=1 // pred_fallthru
      _
    // Predicated region
    $region10: #{bert_classifier_forward.1} parent=1 // pred_check
      _
    $region11: #{bert_classifier_forward.1} parent=1 // pred_check_branch
      %21 = sbr.rel (0) target = $region13
    $region12: #{bert_classifier_forward.1} parent=1 // pred_region
      _
    $region13: #{bert_classifier_forward.1} parent=1 // pred_fallthru
      _
    %v23 = vld [vmem:[%s1] sm:$0xff]
    %v24 = vld [vmem:[%s1 + $0x8] sm:$0xff]
    %v25 = vld [vmem:[%s3] sm:$0x1]
    %v26 = vld [vmem:[%s3 + $0x1] sm:$0x1]
    %vm27 = vcmask 261120
    %v28 = vsel %vm27, %v23, 0.0
    %29 = vadd.xlane.f32.xlu0 %v28
    %v30 = vpop.xlane.xlu0 %29
    %v31 = vsel %vm27, %v24, 0.0
    %32 = vadd.xlane.f32.xlu0 %v31
    %v33 = vpop.xlane.xlu0 %32
    %v34 = vrcp.pop 32.0
    %v35 = vmul.f32 %v30, %v34
    %v36 = vmul.f32 %v33, %v34
    %v37 = vsub.f32 %v23, %v35
    %v38 = vsub.f32 %v24, %v36
    %v39 = vmul.f32 %v37, %v37
    %v40 = vmul.f32 %v38, %v38
    %v41 = vsel %vm27, %v39, 0.0
    %42 = vadd.xlane.f32.xlu0 %v41
    %v43 = vpop.xlane.xlu0 %42
    %v44 = vsel %vm27, %v40, 0.0
    %45 = vadd.xlane.f32.xlu0 %v44
    %v46 = vpop.xlane.xlu0 %45
    %v47 = vmul.f32 %v43, %v34
    %v48 = vmul.f32 %v46, %v34
    %v49 = vadd.f32 %v47, 1e-12
    %v50 = vadd.f32 %v48, 1e-12
    %v51 = vrsqrt.pop %v49
    %v52 = vrsqrt.pop %v50
    %v53 = vmul.f32 %v37, %v51
    %v54 = vmul.f32 %v38, %v52
    %v55 = vlaneseq
    %v56 = vshrl.u32 %v55, 7
    %v57 = vsub.s32 0, %v56
    %v58 = vrot.slane %v25, %v57
    %v59 = vmul.f32 %v53, %v58
    %v60 = vmul.f32 %v54, %v58
    %v61 = vlaneseq
    %v62 = vshrl.u32 %v61, 7
    %v63 = vsub.s32 0, %v62
    %v64 = vrot.slane %v26, %v63
    %v65 = vadd.f32 %v59, %v64
    %v66 = vadd.f32 %v60, %v64
    %v67 = vpack.c.bf16 %v66, %v65
    %v68 = vld [vmem:[%s2] sm:$0xf]
    %v69 = vld [vmem:[%s2 + $0x4] sm:$0xf]
    %v70 = vld [vmem:[%s2 + $0x8] sm:$0xf]
    %v71 = vld [vmem:[%s2 + $0xc] sm:$0xf]
    %v72 = vld [vmem:[%s3 + $0x2] sm:$0x1]
    %v73 = vlaneseq
    %v74 = vshrl.u32 %v73, 7
    %v75 = vsub.s32 0, %v74
    %v76 = vrot.slane %v72, %v75
    %v81 = vunpack.c.l.b16 %v68
    %v82 = vunpack.c.l.b16 %v69
    %v83 = vunpack.c.l.b16 %v70
    %v84 = vunpack.c.l.b16 %v71
    %v85 = vpack.c.b16 %v82, %v81
    %v86 = vpack.c.b16 %v84, %v83
    %v90 = vsel %vm27, %v67, 0
    %92 = vmatprep.subr.bf16.mxu0 0
    %93 = vmatpush1.bf16.msra.mxu0 %v85
    %94 = vmatprep.subr.bf16.mxu0 0
    %95 = vmatpush1.bf16.msra.mxu0 %v86
    %96 = vmatprep.subr.bf16.mxu0 0
    %97 = vmatpush1.bf16.msra.mxu0 0
    %98 = vmatprep.subr.bf16.mxu0 0
    %99 = vmatpush1.bf16.msra.mxu0 0
    %100 = vmatprep.subr.bf16.mxu0 0
    %101 = vmatpush1.bf16.msra.mxu0 0
    %102 = vmatprep.subr.bf16.mxu0 0
    %103 = vmatpush1.bf16.msra.mxu0 0
    %104 = vmatprep.subr.bf16.mxu0 0
    %105 = vmatpush1.bf16.msra.mxu0 0
    %106 = vmatprep.subr.bf16.mxu0 0
    %107 = vmatpush1.bf16.msra.mxu0 0
    %108 = vmatprep.subr.bf16.mxu0 0
    %109 = vmatpush1.bf16.msra.mxu0 0
    %110 = vmatprep.subr.bf16.mxu0 0
    %111 = vmatpush1.bf16.msra.mxu0 0
    %112 = vmatprep.subr.bf16.mxu0 0
    %113 = vmatpush1.bf16.msra.mxu0 0
    %114 = vmatprep.subr.bf16.mxu0 0
    %115 = vmatpush1.bf16.msra.mxu0 0
    %116 = vmatprep.subr.bf16.mxu0 0
    %117 = vmatpush1.bf16.msra.mxu0 0
    %118 = vmatprep.subr.bf16.mxu0 0
    %119 = vmatpush1.bf16.msra.mxu0 0
    %120 = vmatprep.subr.bf16.mxu0 0
    %121 = vmatpush1.bf16.msra.mxu0 0
    %122 = vmatprep.subr.bf16.mxu0 0
    %123 = vmatpush1.bf16.msra.mxu0 0
    %124 = vmatprep.mubr.bf16.mxu0 0
    %125 = vmatmul.mubr.bf16.gmra.mrb[0].mxu0 %v90
    %v126 = vpop.f32.mrb[0].mxu0
    %v127 = vadd.f32 %v76, %v126
    %v128 = vpop.f32.mrb[0].mxu0
    %v129 = vpop.f32.mrb[0].mxu0
    %v130 = vadd.f32 %v76, %v129
    %v131 = vpop.f32.mrb[0].mxu0
    %132 = vdwg.mxu0
    %v133 = vlaneseq
    %v134 = vand.u32 %v133, 127
    %s135 = sld [smem:[#allocation3]]
    %v136 = vstv %s135
    %vm137 = vcmp.lt.s32.totalorder %v134, %v136
    %v138 = vsel %vm137, 0.0, -10000.0
    %v139 = vpack.c.bf16 %v127, %v127
    %141 = vrot.lane.b32.xlu0 %v139, 96
    %v142 = vpop.permute.xlu0 %141
    %v144 = vsel %vm27, %v139, 0
    %v147 = vsel %vm27, %v142, 0
    %149 = vmatprep.subr.bf16.mxu0 0
    %150 = vmatpush1.bf16.xpose.msra.mxu0 %v147
    %151 = vmatprep.subr.bf16.mxu0 0
    %152 = vmatpush1.bf16.xpose.msra.mxu0 0
    %153 = vmatprep.subr.bf16.mxu0 0
    %154 = vmatpush1.bf16.xpose.msra.mxu0 0
    %155 = vmatprep.subr.bf16.mxu0 0
    %156 = vmatpush1.bf16.xpose.msra.mxu0 0
    %157 = vmatprep.subr.bf16.mxu0 0
    %158 = vmatpush1.bf16.xpose.msra.mxu0 0
    %159 = vmatprep.subr.bf16.mxu0 0
    %160 = vmatpush1.bf16.xpose.msra.mxu0 0
    %161 = vmatprep.subr.bf16.mxu0 0
    %162 = vmatpush1.bf16.xpose.msra.mxu0 0
    %163 = vmatprep.subr.bf16.mxu0 0
    %164 = vmatpush1.bf16.xpose.msra.mxu0 0
    %165 = vmatprep.subr.bf16.mxu0 0
    %166 = vmatpush1.bf16.xpose.msra.mxu0 0
    %167 = vmatprep.subr.bf16.mxu0 0
    %168 = vmatpush1.bf16.xpose.msra.mxu0 0
    %169 = vmatprep.subr.bf16.mxu0 0
    %170 = vmatpush1.bf16.xpose.msra.mxu0 0
    %171 = vmatprep.subr.bf16.mxu0 0
    %172 = vmatpush1.bf16.xpose.msra.mxu0 0
    %173 = vmatprep.subr.bf16.mxu0 0
    %174 = vmatpush1.bf16.xpose.msra.mxu0 0
    %175 = vmatprep.subr.bf16.mxu0 0
    %176 = vmatpush1.bf16.xpose.msra.mxu0 0
    %177 = vmatprep.subr.bf16.mxu0 0
    %178 = vmatpush1.bf16.xpose.msra.mxu0 0
    %179 = vmatprep.subr.bf16.mxu0 0
    %180 = vmatpush1.bf16.xpose.msra.mxu0 0
    %181 = vmatprep.mubr.bf16.mxu0 0
    %182 = vmatmul.mubr.bf16.gmra.mrb[0].mxu0 %v144
    %v183 = vpop.f32.mrb[0].mxu0
    %v184 = vadd.f32 0.0, %v183
    %v185 = vpop.f32.mrb[0].mxu0
    %v186 = vpop.f32.mrb[0].mxu0
    %v187 = vpop.f32.mrb[0].mxu0
    %188 = vdwg.mxu0
    %v189 = vmul.f32 %v184, 0.17677669
    %v190 = vadd.f32 %v189, %v138
    %vm191 = vcmask 64512
    %v192 = vsel %vm191, %v190, -inf
    %193 = vmax.xlane.f32.xlu0 %v192
    %v194 = vpop.xlane.xlu0 %193
    %v195 = vsub.f32 %v190, %v194
    %v196 = vmul.f32 %v195, 1.442695
    %v197 = vpow.pop %v196
    %v198 = vsel %vm191, %v197, 0.0
    %199 = vadd.xlane.f32.xlu0 %v198
    %v200 = vpop.xlane.xlu0 %199
    %v201 = vrcp.pop %v200
    %v202 = vmul.f32 %v197, %v201
    %v203 = vpack.c.bf16 %v202, %v202
    %204 = vrot.lane.b32.xlu0 %v139, 64
    %v205 = vpop.permute.xlu0 %204
    %v207 = vsel %vm191, %v203, 0
    %vm209 = vcmask 1043456
    %v211 = vsel %vm209, %v205, 0
    %213 = vmatprep.subr.bf16.mxu0 0
    %214 = vmatpush1.bf16.msra.mxu0 %v211
    %215 = vmatprep.subr.bf16.mxu0 0
    %216 = vmatpush1.bf16.msra.mxu0 0
    %217 = vmatprep.subr.bf16.mxu0 0
    %218 = vmatpush1.bf16.msra.mxu0 0
    %219 = vmatprep.subr.bf16.mxu0 0
    %220 = vmatpush1.bf16.msra.mxu0 0
    %221 = vmatprep.subr.bf16.mxu0 0
    %222 = vmatpush1.bf16.msra.mxu0 0
    %223 = vmatprep.subr.bf16.mxu0 0
    %224 = vmatpush1.bf16.msra.mxu0 0
    %225 = vmatprep.subr.bf16.mxu0 0
    %226 = vmatpush1.bf16.msra.mxu0 0
    %227 = vmatprep.subr.bf16.mxu0 0
    %228 = vmatpush1.bf16.msra.mxu0 0
    %229 = vmatprep.subr.bf16.mxu0 0
    %230 = vmatpush1.bf16.msra.mxu0 0
    %231 = vmatprep.subr.bf16.mxu0 0
    %232 = vmatpush1.bf16.msra.mxu0 0
    %233 = vmatprep.subr.bf16.mxu0 0
    %234 = vmatpush1.bf16.msra.mxu0 0
    %235 = vmatprep.subr.bf16.mxu0 0
    %236 = vmatpush1.bf16.msra.mxu0 0
    %237 = vmatprep.subr.bf16.mxu0 0
    %238 = vmatpush1.bf16.msra.mxu0 0
    %239 = vmatprep.subr.bf16.mxu0 0
    %240 = vmatpush1.bf16.msra.mxu0 0
    %241 = vmatprep.subr.bf16.mxu0 0
    %242 = vmatpush1.bf16.msra.mxu0 0
    %243 = vmatprep.subr.bf16.mxu0 0
    %244 = vmatpush1.bf16.msra.mxu0 0
    %245 = vmatprep.mubr.bf16.mxu0 0
    %246 = vmatmul.mubr.bf16.gmra.mrb[0].mxu0 %v207
    %v247 = vpop.f32.mrb[0].mxu0
    %v248 = vadd.f32 0.0, %v247
    %v249 = vpop.f32.mrb[0].mxu0
    %v250 = vpop.f32.mrb[0].mxu0
    %v251 = vpop.f32.mrb[0].mxu0
    %252 = vdwg.mxu0
    %s253 = sld [smem:[#allocation3 + $0x1]]
    %v254 = vstv %s253
    %vm255 = vcmp.lt.s32.totalorder %v134, %v254
    %v256 = vsel %vm255, 0.0, -10000.0
    %v257 = vpack.c.bf16 %v130, %v130
    %259 = vrot.lane.b32.xlu0 %v257, 96
    %v260 = vpop.permute.xlu0 %259
    %v262 = vsel %vm27, %v257, 0
    %v265 = vsel %vm27, %v260, 0
    %267 = vmatprep.subr.bf16.mxu0 0
    %268 = vmatpush1.bf16.xpose.msra.mxu0 %v265
    %269 = vmatprep.subr.bf16.mxu0 0
    %270 = vmatpush1.bf16.xpose.msra.mxu0 0
    %271 = vmatprep.subr.bf16.mxu0 0
    %272 = vmatpush1.bf16.xpose.msra.mxu0 0
    %273 = vmatprep.subr.bf16.mxu0 0
    %274 = vmatpush1.bf16.xpose.msra.mxu0 0
    %275 = vmatprep.subr.bf16.mxu0 0
    %276 = vmatpush1.bf16.xpose.msra.mxu0 0
    %277 = vmatprep.subr.bf16.mxu0 0
    %278 = vmatpush1.bf16.xpose.msra.mxu0 0
    %279 = vmatprep.subr.bf16.mxu0 0
    %280 = vmatpush1.bf16.xpose.msra.mxu0 0
    %281 = vmatprep.subr.bf16.mxu0 0
    %282 = vmatpush1.bf16.xpose.msra.mxu0 0
    %283 = vmatprep.subr.bf16.mxu0 0
    %284 = vmatpush1.bf16.xpose.msra.mxu0 0
    %285 = vmatprep.subr.bf16.mxu0 0
    %286 = vmatpush1.bf16.xpose.msra.mxu0 0
    %287 = vmatprep.subr.bf16.mxu0 0
    %288 = vmatpush1.bf16.xpose.msra.mxu0 0
    %289 = vmatprep.subr.bf16.mxu0 0
    %290 = vmatpush1.bf16.xpose.msra.mxu0 0
    %291 = vmatprep.subr.bf16.mxu0 0
    %292 = vmatpush1.bf16.xpose.msra.mxu0 0
    %293 = vmatprep.subr.bf16.mxu0 0
    %294 = vmatpush1.bf16.xpose.msra.mxu0 0
    %295 = vmatprep.subr.bf16.mxu0 0
    %296 = vmatpush1.bf16.xpose.msra.mxu0 0
    %297 = vmatprep.subr.bf16.mxu0 0
    %298 = vmatpush1.bf16.xpose.msra.mxu0 0
    %299 = vmatprep.mubr.bf16.mxu0 0
    %300 = vmatmul.mubr.bf16.gmra.mrb[0].mxu0 %v262
    %v301 = vpop.f32.mrb[0].mxu0
    %v302 = vadd.f32 0.0, %v301
    %v303 = vpop.f32.mrb[0].mxu0
    %v304 = vpop.f32.mrb[0].mxu0
    %v305 = vpop.f32.mrb[0].mxu0
    %306 = vdwg.mxu0
    %v307 = vmul.f32 %v302, 0.17677669
    %v308 = vadd.f32 %v307, %v256
    %v309 = vsel %vm191, %v308, -inf
    %310 = vmax.xlane.f32.xlu0 %v309
    %v311 = vpop.xlane.xlu0 %310
    %v312 = vsub.f32 %v308, %v311
    %v313 = vmul.f32 %v312, 1.442695
    %v314 = vpow.pop %v313
    %v315 = vsel %vm191, %v314, 0.0
    %316 = vadd.xlane.f32.xlu0 %v315
    %v317 = vpop.xlane.xlu0 %316
    %v318 = vrcp.pop %v317
    %v319 = vmul.f32 %v314, %v318
    %v320 = vpack.c.bf16 %v319, %v319
    %321 = vrot.lane.b32.xlu0 %v257, 64
    %v322 = vpop.permute.xlu0 %321
    %v324 = vsel %vm191, %v320, 0
    %v327 = vsel %vm209, %v322, 0
    %329 = vmatprep.subr.bf16.mxu0 0
    %330 = vmatpush1.bf16.msra.mxu0 %v327
    %331 = vmatprep.subr.bf16.mxu0 0
    %332 = vmatpush1.bf16.msra.mxu0 0
    %333 = vmatprep.subr.bf16.mxu0 0
    %334 = vmatpush1.bf16.msra.mxu0 0
    %335 = vmatprep.subr.bf16.mxu0 0
    %336 = vmatpush1.bf16.msra.mxu0 0
    %337 = vmatprep.subr.bf16.mxu0 0
    %338 = vmatpush1.bf16.msra.mxu0 0
    %339 = vmatprep.subr.bf16.mxu0 0
    %340 = vmatpush1.bf16.msra.mxu0 0
    %341 = vmatprep.subr.bf16.mxu0 0
    %342 = vmatpush1.bf16.msra.mxu0 0
    %343 = vmatprep.subr.bf16.mxu0 0
    %344 = vmatpush1.bf16.msra.mxu0 0
    %345 = vmatprep.subr.bf16.mxu0 0
    %346 = vmatpush1.bf16.msra.mxu0 0
    %347 = vmatprep.subr.bf16.mxu0 0
    %348 = vmatpush1.bf16.msra.mxu0 0
    %349 = vmatprep.subr.bf16.mxu0 0
    %350 = vmatpush1.bf16.msra.mxu0 0
    %351 = vmatprep.subr.bf16.mxu0 0
    %352 = vmatpush1.bf16.msra.mxu0 0
    %353 = vmatprep.subr.bf16.mxu0 0
    %354 = vmatpush1.bf16.msra.mxu0 0
    %355 = vmatprep.subr.bf16.mxu0 0
    %356 = vmatpush1.bf16.msra.mxu0 0
    %357 = vmatprep.subr.bf16.mxu0 0
    %358 = vmatpush1.bf16.msra.mxu0 0
    %359 = vmatprep.subr.bf16.mxu0 0
    %360 = vmatpush1.bf16.msra.mxu0 0
    %361 = vmatprep.mubr.bf16.mxu0 0
    %362 = vmatmul.mubr.bf16.gmra.mrb[0].mxu0 %v324
    %v363 = vpop.f32.mrb[0].mxu0
    %v364 = vadd.f32 0.0, %v363
    %v365 = vpop.f32.mrb[0].mxu0
    %v366 = vpop.f32.mrb[0].mxu0
    %v367 = vpop.f32.mrb[0].mxu0
    %368 = vdwg.mxu0
    %v369 = vpack.c.bf16 %v364, %v248
    %v370 = vld [vmem:[%s2 + $0x10] sm:$0xf]
    %v371 = vld [vmem:[%s2 + $0x14] sm:$0xf]
    %v372 = vld [vmem:[%s2 + $0x18] sm:$0xf]
    %v373 = vld [vmem:[%s2 + $0x1c] sm:$0xf]
    %v374 = vld [vmem:[%s3 + $0x3] sm:$0x1]
    %v375 = vlaneseq
    %v376 = vshrl.u32 %v375, 7
    %v377 = vsub.s32 0, %v376
    %v378 = vrot.slane %v374, %v377
    %v383 = vunpack.c.l.b16 %v370
    %v384 = vunpack.c.l.b16 %v371
    %v385 = vunpack.c.l.b16 %v372
    %v386 = vunpack.c.l.b16 %v373
    %v387 = vpack.c.b16 %v384, %v383
    %v388 = vpack.c.b16 %v386, %v385
    %v392 = vsel %vm27, %v369, 0
    %394 = vmatprep.subr.bf16.mxu0 0
    %395 = vmatpush1.bf16.msra.mxu0 %v387
    %396 = vmatprep.subr.bf16.mxu0 0
    %397 = vmatpush1.bf16.msra.mxu0 %v388
    %398 = vmatprep.subr.bf16.mxu0 0
    %399 = vmatpush1.bf16.msra.mxu0 0
    %400 = vmatprep.subr.bf16.mxu0 0
    %401 = vmatpush1.bf16.msra.mxu0 0
    %402 = vmatprep.subr.bf16.mxu0 0
    %403 = vmatpush1.bf16.msra.mxu0 0
    %404 = vmatprep.subr.bf16.mxu0 0
    %405 = vmatpush1.bf16.msra.mxu0 0
    %406 = vmatprep.subr.bf16.mxu0 0
    %407 = vmatpush1.bf16.msra.mxu0 0
    %408 = vmatprep.subr.bf16.mxu0 0
    %409 = vmatpush1.bf16.msra.mxu0 0
    %410 = vmatprep.subr.bf16.mxu0 0
    %411 = vmatpush1.bf16.msra.mxu0 0
    %412 = vmatprep.subr.bf16.mxu0 0
    %413 = vmatpush1.bf16.msra.mxu0 0
    %414 = vmatprep.subr.bf16.mxu0 0
    %415 = vmatpush1.bf16.msra.mxu0 0
    %416 = vmatprep.subr.bf16.mxu0 0
    %417 = vmatpush1.bf16.msra.mxu0 0
    %418 = vmatprep.subr.bf16.mxu0 0
    %419 = vmatpush1.bf16.msra.mxu0 0
    %420 = vmatprep.subr.bf16.mxu0 0
    %421 = vmatpush1.bf16.msra.mxu0 0
    %422 = vmatprep.subr.bf16.mxu0 0
    %423 = vmatpush1.bf16.msra.mxu0 0
    %424 = vmatprep.subr.bf16.mxu0 0
    %425 = vmatpush1.bf16.msra.mxu0 0
    %426 = vmatprep.mubr.bf16.mxu0 0
    %427 = vmatmul.mubr.bf16.gmra.mrb[0].mxu0 %v392
    %v428 = vpop.f32.mrb[0].mxu0
    %v429 = vadd.f32 %v378, %v428
    %v430 = vpop.f32.mrb[0].mxu0
    %v431 = vpop.f32.mrb[0].mxu0
    %v432 = vadd.f32 %v378, %v431
    %v433 = vpop.f32.mrb[0].mxu0
    %434 = vdwg.mxu0
    %v435 = vadd.f32 %v65, %v429
    %v436 = vadd.f32 %v66, %v432
    %v437 = vld [vmem:[%s3 + $0x4] sm:$0x1]
    %v438 = vld [vmem:[%s3 + $0x5] sm:$0x1]
    %v439 = vsel %vm27, %v435, 0.0
    %440 = vadd.xlane.f32.xlu0 %v439
    %v441 = vpop.xlane.xlu0 %440
    %v442 = vsel %vm27, %v436, 0.0
    %443 = vadd.xlane.f32.xlu0 %v442
    %v444 = vpop.xlane.xlu0 %443
    %v445 = vmul.f32 %v441, %v34
    %v446 = vmul.f32 %v444, %v34
    %v447 = vsub.f32 %v435, %v445
    %v448 = vsub.f32 %v436, %v446
    %v449 = vmul.f32 %v447, %v447
    %v450 = vmul.f32 %v448, %v448
    %v451 = vsel %vm27, %v449, 0.0
    %452 = vadd.xlane.f32.xlu0 %v451
    %v453 = vpop.xlane.xlu0 %452
    %v454 = vsel %vm27, %v450, 0.0
    %455 = vadd.xlane.f32.xlu0 %v454
    %v456 = vpop.xlane.xlu0 %455
    %v457 = vmul.f32 %v453, %v34
    %v458 = vmul.f32 %v456, %v34
    %v459 = vadd.f32 %v457, 1e-12
    %v460 = vadd.f32 %v458, 1e-12
    %v461 = vrsqrt.pop %v459
    %v462 = vrsqrt.pop %v460
    %v463 = vmul.f32 %v447, %v461
    %v464 = vmul.f32 %v448, %v462
    %v465 = vlaneseq
    %v466 = vshrl.u32 %v465, 7
    %v467 = vsub.s32 0, %v466
    %v468 = vrot.slane %v437, %v467
    %v469 = vmul.f32 %v463, %v468
    %v470 = vmul.f32 %v464, %v468
    %v471 = vlaneseq
    %v472 = vshrl.u32 %v471, 7
    %v473 = vsub.s32 0, %v472
    %v474 = vrot.slane %v438, %v473
    %v475 = vadd.f32 %v469, %v474
    %v476 = vadd.f32 %v470, %v474
    %v477 = vpack.c.bf16 %v476, %v475
    %v478 = vld [vmem:[%s2 + $0x20] sm:$0xf]
    %v479 = vld [vmem:[%s2 + $0x24] sm:$0xf]
    %v480 = vld [vmem:[%s2 + $0x28] sm:$0xf]
    %v481 = vld [vmem:[%s2 + $0x2c] sm:$0xf]
    %v482 = vld [vmem:[%s3 + $0x6] sm:$0x1]
    %v483 = vlaneseq
    %v484 = vshrl.u32 %v483, 7
    %v485 = vsub.s32 0, %v484
    %v486 = vrot.slane %v482, %v485
    %v491 = vunpack.c.l.b16 %v478
    %v492 = vunpack.c.l.b16 %v479
    %v493 = vunpack.c.l.b16 %v480
    %v494 = vunpack.c.l.b16 %v481
    %v495 = vpack.c.b16 %v492, %v491
    %v496 = vpack.c.b16 %v494, %v493
    %v500 = vsel %vm27, %v477, 0
    %502 = vmatprep.subr.bf16.mxu0 0
    %503 = vmatpush1.bf16.msra.mxu0 %v495
    %504 = vmatprep.subr.bf16.mxu0 0
    %505 = vmatpush1.bf16.msra.mxu0 %v496
    %506 = vmatprep.subr.bf16.mxu0 0
    %507 = vmatpush1.bf16.msra.mxu0 0
    %508 = vmatprep.subr.bf16.mxu0 0
    %509 = vmatpush1.bf16.msra.mxu0 0
    %510 = vmatprep.subr.bf16.mxu0 0
    %511 = vmatpush1.bf16.msra.mxu0 0
    %512 = vmatprep.subr.bf16.mxu0 0
    %513 = vmatpush1.bf16.msra.mxu0 0
    %514 = vmatprep.subr.bf16.mxu0 0
    %515 = vmatpush1.bf16.msra.mxu0 0
    %516 = vmatprep.subr.bf16.mxu0 0
    %517 = vmatpush1.bf16.msra.mxu0 0
    %518 = vmatprep.subr.bf16.mxu0 0
    %519 = vmatpush1.bf16.msra.mxu0 0
    %520 = vmatprep.subr.bf16.mxu0 0
    %521 = vmatpush1.bf16.msra.mxu0 0
    %522 = vmatprep.subr.bf16.mxu0 0
    %523 = vmatpush1.bf16.msra.mxu0 0
    %524 = vmatprep.subr.bf16.mxu0 0
    %525 = vmatpush1.bf16.msra.mxu0 0
    %526 = vmatprep.subr.bf16.mxu0 0
    %527 = vmatpush1.bf16.msra.mxu0 0
    %528 = vmatprep.subr.bf16.mxu0 0
    %529 = vmatpush1.bf16.msra.mxu0 0
    %530 = vmatprep.subr.bf16.mxu0 0
    %531 = vmatpush1.bf16.msra.mxu0 0
    %532 = vmatprep.subr.bf16.mxu0 0
    %533 = vmatpush1.bf16.msra.mxu0 0
    %534 = vmatprep.mubr.bf16.mxu0 0
    %535 = vmatmul.mubr.bf16.gmra.mrb[0].mxu0 %v500
    %v536 = vpop.f32.mrb[0].mxu0
    %v537 = vadd.f32 %v486, %v536
    %v538 = vpop.f32.mrb[0].mxu0
    %v539 = vpop.f32.mrb[0].mxu0
    %v540 = vadd.f32 %v486, %v539
    %v541 = vpop.f32.mrb[0].mxu0
    %542 = vdwg.mxu0
    %v543 = vmul.f32 %v537, 0.5
    %v544 = vmul.f32 %v540, 0.5
    %v545 = vmul.f32 %v537, 0.044715
    %v546 = vmul.f32 %v540, 0.044715
    %v547 = vmul.f32 %v545, %v537
    %v548 = vmul.f32 %v546, %v540
    %v549 = vmul.f32 %v547, %v537
    %v550 = vmul.f32 %v548, %v540
    %v551 = vadd.f32 %v537, %v549
    %v552 = vadd.f32 %v540, %v550
    %v553 = vmul.f32 %v551, 0.7978845
    %v554 = vmul.f32 %v552, 0.7978845
    %v555 = vtanh.pop %v553
    %v556 = vtanh.pop %v554
    %v557 = vadd.f32 %v555, 1.0
    %v558 = vadd.f32 %v556, 1.0
    %v559 = vmul.f32 %v543, %v557
    %v560 = vmul.f32 %v544, %v558
    %v561 = vpack.c.bf16 %v560, %v559
    %v562 = vld [vmem:[%s2 + $0x30] sm:$0xf]
    %v563 = vld [vmem:[%s2 + $0x34] sm:$0xf]
    %v564 = vld [vmem:[%s2 + $0x38] sm:$0xf]
    %v565 = vld [vmem:[%s2 + $0x3c] sm:$0xf]
    %v566 = vld [vmem:[%s2 + $0x40] sm:$0xf]
    %v567 = vld [vmem:[%s2 + $0x44] sm:$0xf]
    %v568 = vld [vmem:[%s2 + $0x48] sm:$0xf]
    %v569 = vld [vmem:[%s2 + $0x4c] sm:$0xf]
    %v570 = vld [vmem:[%s3 + $0x7] sm:$0x1]
    %v571 = vlaneseq
    %v572 = vshrl.u32 %v571, 7
    %v573 = vsub.s32 0, %v572
    %v574 = vrot.slane %v570, %v573
    %v583 = vunpack.c.l.b16 %v562
    %v584 = vunpack.c.l.b16 %v563
    %v585 = vunpack.c.l.b16 %v564
    %v586 = vunpack.c.l.b16 %v565
    %v587 = vunpack.c.l.b16 %v566
    %v588 = vunpack.c.l.b16 %v567
    %v589 = vunpack.c.l.b16 %v568
    %v590 = vunpack.c.l.b16 %v569
    %v591 = vpack.c.b16 %v584, %v583
    %v592 = vpack.c.b16 %v586, %v585
    %v593 = vpack.c.b16 %v588, %v587
    %v594 = vpack.c.b16 %v590, %v589
    %vm599 = vcmask 523264
    %v601 = vsel %vm599, %v561, 0
    %603 = vmatprep.subr.bf16.mxu0 0
    %604 = vmatpush1.bf16.msra.mxu0 %v591
    %605 = vmatprep.subr.bf16.mxu0 0
    %606 = vmatpush1.bf16.msra.mxu0 %v592
    %607 = vmatprep.subr.bf16.mxu0 0
    %608 = vmatpush1.bf16.msra.mxu0 %v593
    %609 = vmatprep.subr.bf16.mxu0 0
    %610 = vmatpush1.bf16.msra.mxu0 %v594
    %611 = vmatprep.subr.bf16.mxu0 0
    %612 = vmatpush1.bf16.msra.mxu0 0
    %613 = vmatprep.subr.bf16.mxu0 0
    %614 = vmatpush1.bf16.msra.mxu0 0
    %615 = vmatprep.subr.bf16.mxu0 0
    %616 = vmatpush1.bf16.msra.mxu0 0
    %617 = vmatprep.subr.bf16.mxu0 0
    %618 = vmatpush1.bf16.msra.mxu0 0
    %619 = vmatprep.subr.bf16.mxu0 0
    %620 = vmatpush1.bf16.msra.mxu0 0
    %621 = vmatprep.subr.bf16.mxu0 0
    %622 = vmatpush1.bf16.msra.mxu0 0
    %623 = vmatprep.subr.bf16.mxu0 0
    %624 = vmatpush1.bf16.msra.mxu0 0
    %625 = vmatprep.subr.bf16.mxu0 0
    %626 = vmatpush1.bf16.msra.mxu0 0
    %627 = vmatprep.subr.bf16.mxu0 0
    %628 = vmatpush1.bf16.msra.mxu0 0
    %629 = vmatprep.subr.bf16.mxu0 0
    %630 = vmatpush1.bf16.msra.mxu0 0
    %631 = vmatprep.subr.bf16.mxu0 0
    %632 = vmatpush1.bf16.msra.mxu0 0
    %633 = vmatprep.subr.bf16.mxu0 0
    %634 = vmatpush1.bf16.msra.mxu0 0
    %635 = vmatprep.mubr.bf16.mxu0 0
    %636 = vmatmul.mubr.bf16.gmra.mrb[0].mxu0 %v601
    %v637 = vpop.f32.mrb[0].mxu0
    %v638 = vadd.f32 %v574, %v637
    %v639 = vpop.f32.mrb[0].mxu0
    %v640 = vpop.f32.mrb[0].mxu0
    %v641 = vadd.f32 %v574, %v640
    %v642 = vpop.f32.mrb[0].mxu0
    %643 = vdwg.mxu0
    %v644 = vadd.f32 %v475, %v638
    %v645 = vadd.f32 %v476, %v641
    %v646 = vld [vmem:[%s3 + $0x8] sm:$0x1]
    %v647 = vld [vmem:[%s3 + $0x9] sm:$0x1]
    %v648 = vsel %vm27, %v644, 0.0
    %649 = vadd.xlane.f32.xlu0 %v648
    %v650 = vpop.xlane.xlu0 %649
    %v651 = vsel %vm27, %v645, 0.0
    %652 = vadd.xlane.f32.xlu0 %v651
    %v653 = vpop.xlane.xlu0 %652
    %v654 = vmul.f32 %v650, %v34
    %v655 = vmul.f32 %v653, %v34
    %v656 = vsub.f32 %v644, %v654
    %v657 = vsub.f32 %v645, %v655
    %v658 = vmul.f32 %v656, %v656
    %v659 = vmul.f32 %v657, %v657
    %v660 = vsel %vm27, %v658, 0.0
    %661 = vadd.xlane.f32.xlu0 %v660
    %v662 = vpop.xlane.xlu0 %661
    %v663 = vsel %vm27, %v659, 0.0
    %664 = vadd.xlane.f32.xlu0 %v663
    %v665 = vpop.xlane.xlu0 %664
    %v666 = vmul.f32 %v662, %v34
    %v667 = vmul.f32 %v665, %v34
    %v668 = vadd.f32 %v666, 1e-12
    %v669 = vadd.f32 %v667, 1e-12
    %v670 = vrsqrt.pop %v668
    %v671 = vrsqrt.pop %v669
    %v672 = vmul.f32 %v656, %v670
    %v673 = vmul.f32 %v657, %v671
    %v674 = vlaneseq
    %v675 = vshrl.u32 %v674, 7
    %v676 = vsub.s32 0, %v675
    %v677 = vrot.slane %v646, %v676
    %v678 = vmul.f32 %v672, %v677
    %v679 = vmul.f32 %v673, %v677
    %v680 = vlaneseq
    %v681 = vshrl.u32 %v680, 7
    %v682 = vsub.s32 0, %v681
    %v683 = vrot.slane %v647, %v682
    %v684 = vadd.f32 %v678, %v683
    %v685 = vadd.f32 %v679, %v683
    %v687 = vrot.slane %v685, 7
    %vm689 = vcmask 1040384
    %v690 = vsel %vm689, %v684, %v687
    %v691 = vpack.c.bf16 %v690, %v690
    %v692 = vld [vmem:[%s2 + $0x50] sm:$0xf]
    %v693 = vld [vmem:[%s2 + $0x54] sm:$0xf]
    %v694 = vld [vmem:[%s2 + $0x58] sm:$0xf]
    %v695 = vld [vmem:[%s2 + $0x5c] sm:$0xf]
    %v696 = vld [vmem:[%s3 + $0xa] sm:$0x1]
    %v697 = vlaneseq
    %v698 = vshrl.u32 %v697, 7
    %v699 = vsub.s32 0, %v698
    %v700 = vrot.slane %v696, %v699
    %v705 = vunpack.c.l.b16 %v692
    %v706 = vunpack.c.l.b16 %v693
    %v707 = vunpack.c.l.b16 %v694
    %v708 = vunpack.c.l.b16 %v695
    %v709 = vpack.c.b16 %v706, %v705
    %v710 = vpack.c.b16 %v708, %v707
    %v714 = vsel %vm27, %v691, 0
    %716 = vmatprep.subr.bf16.mxu0 0
    %717 = vmatpush1.bf16.msra.mxu0 %v709
    %718 = vmatprep.subr.bf16.mxu0 0
    %719 = vmatpush1.bf16.msra.mxu0 %v710
    %720 = vmatprep.subr.bf16.mxu0 0
    %721 = vmatpush1.bf16.msra.mxu0 0
    %722 = vmatprep.subr.bf16.mxu0 0
    %723 = vmatpush1.bf16.msra.mxu0 0
    %724 = vmatprep.subr.bf16.mxu0 0
    %725 = vmatpush1.bf16.msra.mxu0 0
    %726 = vmatprep.subr.bf16.mxu0 0
    %727 = vmatpush1.bf16.msra.mxu0 0
    %728 = vmatprep.subr.bf16.mxu0 0
    %729 = vmatpush1.bf16.msra.mxu0 0
    %730 = vmatprep.subr.bf16.mxu0 0
    %731 = vmatpush1.bf16.msra.mxu0 0
    %732 = vmatprep.subr.bf16.mxu0 0
    %733 = vmatpush1.bf16.msra.mxu0 0
    %734 = vmatprep.subr.bf16.mxu0 0
    %735 = vmatpush1.bf16.msra.mxu0 0
    %736 = vmatprep.subr.bf16.mxu0 0
    %737 = vmatpush1.bf16.msra.mxu0 0
    %738 = vmatprep.subr.bf16.mxu0 0
    %739 = vmatpush1.bf16.msra.mxu0 0
    %740 = vmatprep.subr.bf16.mxu0 0
    %741 = vmatpush1.bf16.msra.mxu0 0
    %742 = vmatprep.subr.bf16.mxu0 0
    %743 = vmatpush1.bf16.msra.mxu0 0
    %744 = vmatprep.subr.bf16.mxu0 0
    %745 = vmatpush1.bf16.msra.mxu0 0
    %746 = vmatprep.subr.bf16.mxu0 0
    %747 = vmatpush1.bf16.msra.mxu0 0
    %748 = vmatprep.mubr.bf16.mxu0 0
    %749 = vmatmul.mubr.bf16.gmra.mrb[0].mxu0 %v714
    %v750 = vpop.f32.mrb[0].mxu0
    %v751 = vadd.f32 %v700, %v750
    %v752 = vpop.f32.mrb[0].mxu0
    %v753 = vpop.f32.mrb[0].mxu0
    %v754 = vpop.f32.mrb[0].mxu0
    %755 = vdwg.mxu0
    %v756 = vtanh.pop %v751
    %v757 = vpack.c.bf16 %v756, %v756
    %v758 = vld [vmem:[%s2 + $0x60] sm:$0xf]
    %v759 = vld [vmem:[%s2 + $0x64] sm:$0xf]
    %v760 = vld [vmem:[%s2 + $0x68] sm:$0xf]
    %v761 = vld [vmem:[%s2 + $0x6c] sm:$0xf]
    %v762 = vld [vmem:[%s3 + $0xb] sm:$0x1]
    %v763 = vlaneseq
    %v764 = vshrl.u32 %v763, 7
    %v765 = vsub.s32 0, %v764
    %v766 = vrot.slane %v762, %v765
    %v771 = vunpack.c.l.b16 %v758
    %v772 = vunpack.c.l.b16 %v759
    %v773 = vunpack.c.l.b16 %v760
    %v774 = vunpack.c.l.b16 %v761
    %v775 = vpack.c.b16 %v772, %v771
    %v776 = vpack.c.b16 %v774, %v773
    %v780 = vsel %vm27, %v757, 0
    %782 = vmatprep.subr.bf16.mxu0 0
    %783 = vmatpush1.bf16.msra.mxu0 %v775
    %784 = vmatprep.subr.bf16.mxu0 0
    %785 = vmatpush1.bf16.msra.mxu0 %v776
    %786 = vmatprep.subr.bf16.mxu0 0
    %787 = vmatpush1.bf16.msra.mxu0 0
    %788 = vmatprep.subr.bf16.mxu0 0
    %789 = vmatpush1.bf16.msra.mxu0 0
    %790 = vmatprep.subr.bf16.mxu0 0
    %791 = vmatpush1.bf16.msra.mxu0 0
    %792 = vmatprep.subr.bf16.mxu0 0
    %793 = vmatpush1.bf16.msra.mxu0 0
    %794 = vmatprep.subr.bf16.mxu0 0
    %795 = vmatpush1.bf16.msra.mxu0 0
    %796 = vmatprep.subr.bf16.mxu0 0
    %797 = vmatpush1.bf16.msra.mxu0 0
    %798 = vmatprep.subr.bf16.mxu0 0
    %799 = vmatpush1.bf16.msra.mxu0 0
    %800 = vmatprep.subr.bf16.mxu0 0
    %801 = vmatpush1.bf16.msra.mxu0 0
    %802 = vmatprep.subr.bf16.mxu0 0
    %803 = vmatpush1.bf16.msra.mxu0 0
    %804 = vmatprep.subr.bf16.mxu0 0
    %805 = vmatpush1.bf16.msra.mxu0 0
    %806 = vmatprep.subr.bf16.mxu0 0
    %807 = vmatpush1.bf16.msra.mxu0 0
    %808 = vmatprep.subr.bf16.mxu0 0
    %809 = vmatpush1.bf16.msra.mxu0 0
    %810 = vmatprep.subr.bf16.mxu0 0
    %811 = vmatpush1.bf16.msra.mxu0 0
    %812 = vmatprep.subr.bf16.mxu0 0
    %813 = vmatpush1.bf16.msra.mxu0 0
    %814 = vmatprep.mubr.bf16.mxu0 0
    %815 = vmatmul.mubr.bf16.gmra.mrb[0].mxu0 %v780
    %v816 = vpop.f32.mrb[0].mxu0
    %v817 = vadd.f32 %v766, %v816
    %v818 = vpop.f32.mrb[0].mxu0
    %v819 = vpop.f32.mrb[0].mxu0
    %v820 = vpop.f32.mrb[0].mxu0
    %821 = vdwg.mxu0
    %822 = vst [vmem:[#allocation4] sm:$0x3] %v817
    // Predicated region
    $region14: #{bert_classifier_forward.1} parent=1 // pred_check
      _
    $region15: #{bert_classifier_forward.1} parent=1 // pred_check_branch
      %824 = sbr.rel (0) target = $region17
    $region16: #{bert_classifier_forward.1} parent=1 // pred_region
      %s826 = ssub.s32 32, 32
      %827 = vsyncadd [#allocation5], %s826
      %s829 = sshll.u32 [#allocation4], 4
      %s830 = int_to_ptr.vmem [resolvable:$true] %s829
      %832 = dma.vmem_to_hbm [thread:$0]  %s830, 32, %s4, [#allocation5]
    $region17: #{bert_classifier_forward.1} parent=1 // pred_fallthru
      _
    // Predicated region
    $region18: #{bert_classifier_forward.1} parent=1 // pred_check
      _
    $region19: #{bert_classifier_forward.1} parent=1 // pred_check_branch
      %834 = sbr.rel (0) target = $region21
    $region20: #{bert_classifier_forward.1} parent=1 // pred_region
      %835 = dma.done [#allocation5], 32
    $region21: #{bert_classifier_forward.1} parent=1 // pred_fallthru
      _
    %836 = vsyncpa [#allocation5], 1

</llo_original>
